<compile_context>
chip_gen: v7x
topology: tpu7x:2x2x1
jax: 0.10.0
libtpu: 0.0.40
codegen_flags: <defaults>
</compile_context>

<pallas_src>
import math
import functools

import jax
import jax.numpy as jnp
from jax.experimental import pallas as pl
from jax.experimental.pallas import tpu as pltpu


def _cross_attention_kernel(x_ref, wqkv_ref, bqkv_ref, seg_ref, segt_ref,
                            wc_ref, bc_ref, gamma_ref, beta_ref, o_ref,
                            *, nb, n_points, hd, pad):
    """One grid step processes `nb` batches laid out as nb*N consecutive rows of x."""
    # ---- fused Q/K/V projection for all nb*N rows: one MXU push ----
    qkv = jnp.dot(x_ref[...], wqkv_ref[...],
                  preferred_element_type=jnp.float32) + bqkv_ref[...]   # (nb*N, 3*pad)

    outs = []
    for b in range(nb):                     # statically unrolled (nb is 1 or B); the
        r0 = b * n_points                   # per-batch chains are independent -> interleave
        q = qkv[r0:r0 + 1, 0:hd]                            # (1, HD) query = first point only
        k = qkv[r0:r0 + n_points, pad:pad + hd]             # (N, HD) tile-aligned slice
        v = qkv[r0:r0 + n_points, 2 * pad:2 * pad + hd]     # (N, HD) tile-aligned slice

        # scores[j,h] = scale * sum_{d in head h} q[d] * k[j,d]  (scale folded into seg)
        s = jnp.dot(k * q, seg_ref[...], preferred_element_type=jnp.float32)   # (N, H)

        # softmax over keys j  (== Softmax(dim=-1) on (B,H,1,N) in the module)
        s = s - jnp.max(s, axis=0, keepdims=True)
        e = jnp.exp(s)
        attn = e * pl.reciprocal(jnp.sum(e, axis=0, keepdims=True), approx=True)

        # cross-head renormalization: attn / (1e-9 + sum_over_heads attn)
        hsum = jnp.sum(attn, axis=1, keepdims=True)                             # (N, 1)
        attn = attn * pl.reciprocal(1e-9 + hsum, approx=True)
        # TODO(synk): nn.Dropout(0.1) on the attention weights is identity in eval mode.

        # ctx[f] = sum_j attn[j, head(f)] * v[j, f]   (flat head-concat layout)
        attn_e = jnp.dot(attn, segt_ref[...], preferred_element_type=jnp.float32)  # (N, HD)
        ctx = jnp.sum(attn_e * v, axis=0, keepdims=True)                            # (1, HD)

        # Conv1d(kernel=1) on (query - ctx)  ==  (q - ctx) @ Wc + bc
        y = jnp.dot(q - ctx, wc_ref[...],
                    preferred_element_type=jnp.float32) + bc_ref[...]               # (1, F)

        # LayerNorm(F) (eps=1e-5) + LeakyReLU(0.02) + residual with the (unscaled) query
        mu = jnp.mean(y, axis=-1, keepdims=True)
        var = jnp.mean(jnp.square(y - mu), axis=-1, keepdims=True)
        ln = (y - mu) * jax.lax.rsqrt(var + 1e-5) * gamma_ref[...] + beta_ref[...]
        act = jnp.where(ln >= 0, ln, 0.02 * ln)
        outs.append(q + act)                                                         # (1, F)

    out2d = outs[0] if nb == 1 else jnp.concatenate(outs, axis=0)                    # (nb, F)
    o_ref[:, 0, :] = out2d.astype(o_ref.dtype)                                       # one store


def prepare_params(params, *, num_heads, d_k):
    """One-time parameter prep (hoisted out of the forward per perf review)."""
    wq, bq, wk, bk, wv, bv, wc, bc, gamma, beta = params
    f_in = wq.shape[0]
    hd = num_heads * d_k
    pad = ((hd + 127) // 128) * 128          # tile-align each projection output block
    scale = 1.0 / math.sqrt(d_k)

    wqkv = jnp.zeros((f_in, 3 * pad), jnp.float32)
    wqkv = (wqkv.at[:, 0:hd].set(wq)
                 .at[:, pad:pad + hd].set(wk)
                 .at[:, 2 * pad:2 * pad + hd].set(wv))
    bqkv = jnp.zeros((1, 3 * pad), jnp.float32)
    bqkv = (bqkv.at[:, 0:hd].set(bq)
                 .at[:, pad:pad + hd].set(bk)
                 .at[:, 2 * pad:2 * pad + hd].set(bv))

    # Constant head-segment matrices; `scale` folded into the score-side one.
    f_idx = jnp.arange(hd)[:, None]
    h_idx = jnp.arange(num_heads)[None, :]
    seg = (f_idx // d_k == h_idx).astype(jnp.float32)       # (HD, H)
    seg_s = seg * scale                                     # (HD, H) pre-scaled
    seg_t = seg.T                                           # (H, HD)

    return (wqkv, bqkv, seg_s, seg_t, wc, bc, gamma, beta), pad


def _default_batches_per_step(batch):
    # v7x has 2 TensorCores/chip: one batch per "parallel" grid step keeps both busy.
    # v5e/v6e are single-TC: collapse the grid to one fused step (per perf review).
    try:
        kind = jax.devices()[0].device_kind.lower()
        if ("v7" in kind) and batch >= 2:
            return 1
    except Exception:
        pass
    return batch


def cross_attention(x, prepared, pad, *, num_heads, d_k, batches_per_step=None):
    """x: (B, N, F) float32; returns (B, 1, F) — matches the PyTorch module output."""
    B, N, F = x.shape
    hd = num_heads * d_k
    assert hd == F, "module requires num_heads * d_k == in_feature (Conv1d/residual)"
    wqkv, bqkv, seg_s, seg_t, wc, bc, gamma, beta = prepared

    nb = batches_per_step if batches_per_step is not None else _default_batches_per_step(B)
    assert B % nb == 0
    grid = (B // nb,)

    kernel = functools.partial(_cross_attention_kernel,
                               nb=nb, n_points=N, hd=hd, pad=pad)

    const2d = lambda shape: pl.BlockSpec(shape, lambda g: (0, 0))  # grid-invariant (resident)

    grid_spec = pl.GridSpec(
        grid=grid,
        in_specs=[
            pl.BlockSpec((nb * N, F), lambda g: (g, 0)),   # nb batches of points per step
            const2d((F, 3 * pad)),                         # fused, tile-aligned Wqkv
            const2d((1, 3 * pad)),                         # fused bqkv
            const2d(seg_s.shape),                          # head-segment (pre-scaled)
            const2d(seg_t.shape),                          # head-segment transpose
            const2d((F, F)),                               # Conv1d weight (as (in, out))
            const2d((1, F)),                               # Conv1d bias
            const2d((1, F)),                               # LayerNorm gamma
            const2d((1, F)),                               # LayerNorm beta
        ],
        out_specs=pl.BlockSpec((nb, 1, F), lambda g: (g, 0, 0)),
    )

    x_flat = x.reshape(B * N, F)   # free layout-preserving reshape outside the kernel
    return pl.pallas_call(
        kernel,
        out_shape=jax.ShapeDtypeStruct((B, 1, F), x.dtype),
        grid_spec=grid_spec,
        compiler_params=pltpu.CompilerParams(
            dimension_semantics=("parallel",)),
    )(x_flat, wqkv, bqkv, seg_s, seg_t, wc, bc, gamma, beta)


def _reference(x, params, *, num_heads, d_k):
    """Pure-JAX reference mirroring the PyTorch CrossAttention.forward exactly."""
    wq, bq, wk, bk, wv, bv, wc, bc, gamma, beta = params
    B, N, F = x.shape
    H = num_heads
    scale = 1.0 / math.sqrt(d_k)

    xp = jnp.transpose(x, (1, 0, 2))                           # (N, B, F)
    q = (xp[0:1] @ wq + bq).reshape(1, B, H, d_k)              # query from first point
    k = (xp @ wk + bk).reshape(N, B, H, d_k)
    v = (xp @ wv + bv).reshape(N, B, H, d_k)
    q = jnp.transpose(q, (1, 2, 0, 3))                         # (B, H, 1, d_k)
    k = jnp.transpose(k, (1, 2, 0, 3))                         # (B, H, N, d_k)
    v = jnp.transpose(v, (1, 2, 0, 3))

    scores = jnp.einsum('bhid,bhjd->bhij', q, k) * scale       # (B, H, 1, N)
    attn = jax.nn.softmax(scores, axis=-1)
    attn = attn / (1e-9 + jnp.sum(attn, axis=1, keepdims=True))  # cross-head renorm
    ctx = jnp.einsum('bhij,bhjd->bhid', attn, v)               # (B, H, 1, d_k)

    q_flat = jnp.transpose(q, (0, 2, 1, 3)).reshape(B, 1, H * d_k)
    ctx_flat = jnp.transpose(ctx, (0, 2, 1, 3)).reshape(B, 1, H * d_k)

    y = (q_flat - ctx_flat) @ wc + bc                          # Conv1d(k=1) == linear
    mu = jnp.mean(y, axis=-1, keepdims=True)
    var = jnp.mean((y - mu) ** 2, axis=-1, keepdims=True)
    ln = (y - mu) / jnp.sqrt(var + 1e-5) * gamma + beta
    act = jnp.where(ln >= 0, ln, 0.02 * ln)
    return q_flat + act                                        # (B, 1, F)


def init_params(key, in_feature, num_heads, d_model):
    d_k = d_model // num_heads
    HD = num_heads * d_k
    ks = jax.random.split(key, 8)

    def lin(kw, kb, fan_in, fan_out):
        bound = 1.0 / math.sqrt(fan_in)
        w = jax.random.uniform(kw, (fan_in, fan_out), jnp.float32, -bound, bound)
        b = jax.random.uniform(kb, (1, fan_out), jnp.float32, -bound, bound)
        return w, b

    wq, bq = lin(ks[0], ks[1], in_feature, HD)
    wk, bk = lin(ks[2], ks[3], in_feature, HD)
    wv, bv = lin(ks[4], ks[5], in_feature, HD)
    wc, bc = lin(ks[6], ks[7], in_feature, in_feature)   # Conv1d(k=1) weight as (in, out)
    gamma = jnp.ones((1, in_feature), jnp.float32)       # LayerNorm defaults
    beta = jnp.zeros((1, in_feature), jnp.float32)
    return (wq, bq, wk, bk, wv, bv, wc, bc, gamma, beta)


if __name__ == "__main__":
    # Small shapes consistent with the module: in_feature == d_model so the
    # Conv1d(in_feature, in_feature, 1) and the residual with the query type-check.
    B, N = 2, 8
    in_feature = 32
    num_heads = 4
    d_model = 32
    d_k = d_model // num_heads

    key = jax.random.PRNGKey(0)
    kx, kp = jax.random.split(key)
    x = jax.random.normal(kx, (B, N, in_feature), dtype=jnp.float32)
    params = init_params(kp, in_feature, num_heads, d_model)

    # One-time parameter prep (weight fusion, tile-aligned padding, seg matrices).
    prepared, pad = prepare_params(params, num_heads=num_heads, d_k=d_k)

    ref = _reference(x, params, num_heads=num_heads, d_k=d_k)

    # Tolerance slightly relaxed because pl.reciprocal(approx=True) is used for the
    # softmax / cross-head normalizers; everything else is exact f32.
    def check(out):
        assert out.shape == (B, 1, in_feature)
        assert jnp.allclose(out, ref, atol=5e-3, rtol=5e-3), "mismatch vs reference"

    # Auto mode: collapsed single grid step on v5e/v6e, one batch per TC on v7x.
    out = cross_attention(x, prepared, pad, num_heads=num_heads, d_k=d_k)
    out = jax.block_until_ready(out)
    check(out)

    # Explicitly validate both grid configurations (collapsed and per-batch/v7x).
    out_c = cross_attention(x, prepared, pad, num_heads=num_heads, d_k=d_k,
                            batches_per_step=B)
    check(jax.block_until_ready(out_c))
    out_pb = cross_attention(x, prepared, pad, num_heads=num_heads, d_k=d_k,
                             batches_per_step=1)
    check(jax.block_until_ready(out_pb))

    print("KERNEL_OK")
</pallas_src>

<mosaic_0001>
module attributes {stable_mosaic.version = 11 : i64} {
  func.func @_cross_attention_kernel(%arg0: i32, %arg1: memref<16x32xf32, #tpu.memory_space<vmem>>, %arg2: memref<32x384xf32, #tpu.memory_space<vmem>>, %arg3: memref<1x384xf32, #tpu.memory_space<vmem>>, %arg4: memref<32x4xf32, #tpu.memory_space<vmem>>, %arg5: memref<4x32xf32, #tpu.memory_space<vmem>>, %arg6: memref<32x32xf32, #tpu.memory_space<vmem>>, %arg7: memref<1x32xf32, #tpu.memory_space<vmem>>, %arg8: memref<1x32xf32, #tpu.memory_space<vmem>>, %arg9: memref<1x32xf32, #tpu.memory_space<vmem>>, %arg10: memref<2x1x32xf32, #tpu.memory_space<vmem>>) attributes {dimension_semantics = [#tpu.dimension_semantics<parallel>], iteration_bounds = array<i64: 1>, scalar_prefetch = 0 : i64, scratch_operands = 0 : i64, tpu.core_type = #tpu.core_type<tc>, window_params = [{transform_indices = @transform_0, window_bounds = array<i64: 16, 32>}, {pipeline_mode = #tpu.pipeline_mode<synchronous>, transform_indices = @transform_1, window_bounds = array<i64: 32, 384>}, {pipeline_mode = #tpu.pipeline_mode<synchronous>, transform_indices = @transform_2, window_bounds = array<i64: 1, 384>}, {pipeline_mode = #tpu.pipeline_mode<synchronous>, transform_indices = @transform_3, window_bounds = array<i64: 32, 4>}, {pipeline_mode = #tpu.pipeline_mode<synchronous>, transform_indices = @transform_4, window_bounds = array<i64: 4, 32>}, {pipeline_mode = #tpu.pipeline_mode<synchronous>, transform_indices = @transform_5, window_bounds = array<i64: 32, 32>}, {pipeline_mode = #tpu.pipeline_mode<synchronous>, transform_indices = @transform_6, window_bounds = array<i64: 1, 32>}, {pipeline_mode = #tpu.pipeline_mode<synchronous>, transform_indices = @transform_7, window_bounds = array<i64: 1, 32>}, {pipeline_mode = #tpu.pipeline_mode<synchronous>, transform_indices = @transform_8, window_bounds = array<i64: 1, 32>}, {transform_indices = @transform_9, window_bounds = array<i64: 2, 1, 32>}]} {
    %c0 = arith.constant 0 : index
    %c0_0 = arith.constant 0 : index
    %0 = vector.load %arg1[%c0, %c0_0] : memref<16x32xf32, #tpu.memory_space<vmem>>, vector<16x32xf32>
    %c0_1 = arith.constant 0 : index
    %c0_2 = arith.constant 0 : index
    %1 = vector.load %arg2[%c0_1, %c0_2] : memref<32x384xf32, #tpu.memory_space<vmem>>, vector<32x384xf32>
    %cst = arith.constant dense<0.000000e+00> : vector<16x384xf32>
    %2 = tpu.matmul %0, %1, %cst {dimension_numbers = #tpu.dot_dimension_numbers<[1], [0], [0], [1], [0, 0, 1, 1], [], []>} : vector<16x32xf32>, vector<32x384xf32>, vector<16x384xf32> -> vector<16x384xf32>
    %c0_3 = arith.constant 0 : index
    %c0_4 = arith.constant 0 : index
    %3 = vector.load %arg3[%c0_3, %c0_4] : memref<1x384xf32, #tpu.memory_space<vmem>>, vector<1x384xf32>
    %4 = vector.broadcast %3 : vector<1x384xf32> to vector<16x384xf32>
    %5 = arith.addf %2, %4 : vector<16x384xf32>
    %6 = vector.extract_strided_slice %5 {offsets = [0, 0], sizes = [1, 32], strides = [1, 1]} : vector<16x384xf32> to vector<1x32xf32>
    %7 = vector.extract_strided_slice %5 {offsets = [0, 128], sizes = [8, 32], strides = [1, 1]} : vector<16x384xf32> to vector<8x32xf32>
    %8 = vector.extract_strided_slice %5 {offsets = [0, 256], sizes = [8, 32], strides = [1, 1]} : vector<16x384xf32> to vector<8x32xf32>
    %9 = vector.broadcast %6 : vector<1x32xf32> to vector<8x32xf32>
    %10 = arith.mulf %7, %9 : vector<8x32xf32>
    %c0_5 = arith.constant 0 : index
    %c0_6 = arith.constant 0 : index
    %11 = vector.load %arg4[%c0_5, %c0_6] : memref<32x4xf32, #tpu.memory_space<vmem>>, vector<32x4xf32>
    %cst_7 = arith.constant dense<0.000000e+00> : vector<8x4xf32>
    %12 = tpu.matmul %10, %11, %cst_7 {dimension_numbers = #tpu.dot_dimension_numbers<[1], [0], [0], [1], [0, 0, 1, 1], [], []>} : vector<8x32xf32>, vector<32x4xf32>, vector<8x4xf32> -> vector<8x4xf32>
    %cst_8 = arith.constant dense<0xFF800000> : vector<4xf32>
    %13 = vector.multi_reduction <maximumf>, %12, %cst_8 [0] : vector<8x4xf32> to vector<4xf32>
    %14 = vector.shape_cast %13 : vector<4xf32> to vector<1x4xf32>
    %15 = vector.broadcast %14 : vector<1x4xf32> to vector<8x4xf32>
    %16 = arith.subf %12, %15 : vector<8x4xf32>
    %17 = math.exp %16 : vector<8x4xf32>
    %cst_9 = arith.constant dense<0.000000e+00> : vector<4xf32>
    %18 = vector.multi_reduction <add>, %17, %cst_9 [0] : vector<8x4xf32> to vector<4xf32>
    %19 = vector.shape_cast %18 : vector<4xf32> to vector<1x4xf32>
    %20 = tpu.reciprocal %19 {approx = true} : vector<1x4xf32> -> vector<1x4xf32>
    %21 = vector.broadcast %20 : vector<1x4xf32> to vector<8x4xf32>
    %22 = arith.mulf %17, %21 : vector<8x4xf32>
    %cst_10 = arith.constant dense<0.000000e+00> : vector<8xf32>
    %23 = vector.multi_reduction <add>, %22, %cst_10 [1] : vector<8x4xf32> to vector<8xf32>
    %24 = vector.shape_cast %23 : vector<8xf32> to vector<8x1xf32>
    %cst_11 = arith.constant 9.99999971E-10 : f32
    %25 = vector.broadcast %cst_11 : f32 to vector<8x1xf32>
    %26 = arith.addf %25, %24 : vector<8x1xf32>
    %27 = tpu.reciprocal %26 {approx = true} : vector<8x1xf32> -> vector<8x1xf32>
    %28 = vector.broadcast %27 : vector<8x1xf32> to vector<8x4xf32>
    %29 = arith.mulf %22, %28 : vector<8x4xf32>
    %c0_12 = arith.constant 0 : index
    %c0_13 = arith.constant 0 : index
    %30 = vector.load %arg5[%c0_12, %c0_13] : memref<4x32xf32, #tpu.memory_space<vmem>>, vector<4x32xf32>
    %cst_14 = arith.constant dense<0.000000e+00> : vector<8x32xf32>
    %31 = tpu.matmul %29, %30, %cst_14 {dimension_numbers = #tpu.dot_dimension_numbers<[1], [0], [0], [1], [0, 0, 1, 1], [], []>} : vector<8x4xf32>, vector<4x32xf32>, vector<8x32xf32> -> vector<8x32xf32>
    %32 = arith.mulf %31, %8 : vector<8x32xf32>
    %cst_15 = arith.constant dense<0.000000e+00> : vector<32xf32>
    %33 = vector.multi_reduction <add>, %32, %cst_15 [0] : vector<8x32xf32> to vector<32xf32>
    %34 = vector.shape_cast %33 : vector<32xf32> to vector<1x32xf32>
    %35 = arith.subf %6, %34 : vector<1x32xf32>
    %c0_16 = arith.constant 0 : index
    %c0_17 = arith.constant 0 : index
    %36 = vector.load %arg6[%c0_16, %c0_17] : memref<32x32xf32, #tpu.memory_space<vmem>>, vector<32x32xf32>
    %cst_18 = arith.constant dense<0.000000e+00> : vector<1x32xf32>
    %37 = tpu.matmul %35, %36, %cst_18 {dimension_numbers = #tpu.dot_dimension_numbers<[1], [0], [0], [1], [0, 0, 1, 1], [], []>} : vector<1x32xf32>, vector<32x32xf32>, vector<1x32xf32> -> vector<1x32xf32>
    %c0_19 = arith.constant 0 : index
    %c0_20 = arith.constant 0 : index
    %38 = vector.load %arg7[%c0_19, %c0_20] : memref<1x32xf32, #tpu.memory_space<vmem>>, vector<1x32xf32>
    %39 = arith.addf %37, %38 : vector<1x32xf32>
    %cst_21 = arith.constant dense<0.000000e+00> : vector<1xf32>
    %40 = vector.multi_reduction <add>, %39, %cst_21 [1] : vector<1x32xf32> to vector<1xf32>
    %41 = vector.shape_cast %40 : vector<1xf32> to vector<1x1xf32>
    %cst_22 = arith.constant 3.200000e+01 : f32
    %42 = vector.broadcast %cst_22 : f32 to vector<1x1xf32>
    %43 = arith.divf %41, %42 : vector<1x1xf32>
    %44 = vector.broadcast %43 : vector<1x1xf32> to vector<1x32xf32>
    %45 = arith.subf %39, %44 : vector<1x32xf32>
    %46 = arith.mulf %45, %45 : vector<1x32xf32>
    %cst_23 = arith.constant dense<0.000000e+00> : vector<1xf32>
    %47 = vector.multi_reduction <add>, %46, %cst_23 [1] : vector<1x32xf32> to vector<1xf32>
    %48 = vector.shape_cast %47 : vector<1xf32> to vector<1x1xf32>
    %cst_24 = arith.constant 3.200000e+01 : f32
    %49 = vector.broadcast %cst_24 : f32 to vector<1x1xf32>
    %50 = arith.divf %48, %49 : vector<1x1xf32>
    %51 = vector.broadcast %43 : vector<1x1xf32> to vector<1x32xf32>
    %52 = arith.subf %39, %51 : vector<1x32xf32>
    %cst_25 = arith.constant 9.99999974E-6 : f32
    %53 = vector.broadcast %cst_25 : f32 to vector<1x1xf32>
    %54 = arith.addf %50, %53 : vector<1x1xf32>
    %55 = math.rsqrt %54 : vector<1x1xf32>
    %56 = vector.broadcast %55 : vector<1x1xf32> to vector<1x32xf32>
    %57 = arith.mulf %52, %56 : vector<1x32xf32>
    %c0_26 = arith.constant 0 : index
    %c0_27 = arith.constant 0 : index
    %58 = vector.load %arg8[%c0_26, %c0_27] : memref<1x32xf32, #tpu.memory_space<vmem>>, vector<1x32xf32>
    %59 = arith.mulf %57, %58 : vector<1x32xf32>
    %c0_28 = arith.constant 0 : index
    %c0_29 = arith.constant 0 : index
    %60 = vector.load %arg9[%c0_28, %c0_29] : memref<1x32xf32, #tpu.memory_space<vmem>>, vector<1x32xf32>
    %61 = arith.addf %59, %60 : vector<1x32xf32>
    %cst_30 = arith.constant 0.000000e+00 : f32
    %62 = vector.broadcast %cst_30 : f32 to vector<1x32xf32>
    %63 = arith.cmpf oge, %61, %62 : vector<1x32xf32>
    %cst_31 = arith.constant 2.000000e-02 : f32
    %64 = vector.broadcast %cst_31 : f32 to vector<1x32xf32>
    %65 = arith.mulf %64, %61 : vector<1x32xf32>
    %66 = arith.select %63, %61, %65 : vector<1x32xi1>, vector<1x32xf32>
    %67 = arith.addf %6, %66 : vector<1x32xf32>
    %68 = vector.extract_strided_slice %5 {offsets = [8, 0], sizes = [1, 32], strides = [1, 1]} : vector<16x384xf32> to vector<1x32xf32>
    %69 = vector.extract_strided_slice %5 {offsets = [8, 128], sizes = [8, 32], strides = [1, 1]} : vector<16x384xf32> to vector<8x32xf32>
    %70 = vector.extract_strided_slice %5 {offsets = [8, 256], sizes = [8, 32], strides = [1, 1]} : vector<16x384xf32> to vector<8x32xf32>
    %71 = vector.broadcast %68 : vector<1x32xf32> to vector<8x32xf32>
    %72 = arith.mulf %69, %71 : vector<8x32xf32>
    %c0_32 = arith.constant 0 : index
    %c0_33 = arith.constant 0 : index
    %73 = vector.load %arg4[%c0_32, %c0_33] : memref<32x4xf32, #tpu.memory_space<vmem>>, vector<32x4xf32>
    %cst_34 = arith.constant dense<0.000000e+00> : vector<8x4xf32>
    %74 = tpu.matmul %72, %73, %cst_34 {dimension_numbers = #tpu.dot_dimension_numbers<[1], [0], [0], [1], [0, 0, 1, 1], [], []>} : vector<8x32xf32>, vector<32x4xf32>, vector<8x4xf32> -> vector<8x4xf32>
    %cst_35 = arith.constant dense<0xFF800000> : vector<4xf32>
    %75 = vector.multi_reduction <maximumf>, %74, %cst_35 [0] : vector<8x4xf32> to vector<4xf32>
    %76 = vector.shape_cast %75 : vector<4xf32> to vector<1x4xf32>
    %77 = vector.broadcast %76 : vector<1x4xf32> to vector<8x4xf32>
    %78 = arith.subf %74, %77 : vector<8x4xf32>
    %79 = math.exp %78 : vector<8x4xf32>
    %cst_36 = arith.constant dense<0.000000e+00> : vector<4xf32>
    %80 = vector.multi_reduction <add>, %79, %cst_36 [0] : vector<8x4xf32> to vector<4xf32>
    %81 = vector.shape_cast %80 : vector<4xf32> to vector<1x4xf32>
    %82 = tpu.reciprocal %81 {approx = true} : vector<1x4xf32> -> vector<1x4xf32>
    %83 = vector.broadcast %82 : vector<1x4xf32> to vector<8x4xf32>
    %84 = arith.mulf %79, %83 : vector<8x4xf32>
    %cst_37 = arith.constant dense<0.000000e+00> : vector<8xf32>
    %85 = vector.multi_reduction <add>, %84, %cst_37 [1] : vector<8x4xf32> to vector<8xf32>
    %86 = vector.shape_cast %85 : vector<8xf32> to vector<8x1xf32>
    %cst_38 = arith.constant 9.99999971E-10 : f32
    %87 = vector.broadcast %cst_38 : f32 to vector<8x1xf32>
    %88 = arith.addf %87, %86 : vector<8x1xf32>
    %89 = tpu.reciprocal %88 {approx = true} : vector<8x1xf32> -> vector<8x1xf32>
    %90 = vector.broadcast %89 : vector<8x1xf32> to vector<8x4xf32>
    %91 = arith.mulf %84, %90 : vector<8x4xf32>
    %c0_39 = arith.constant 0 : index
    %c0_40 = arith.constant 0 : index
    %92 = vector.load %arg5[%c0_39, %c0_40] : memref<4x32xf32, #tpu.memory_space<vmem>>, vector<4x32xf32>
    %cst_41 = arith.constant dense<0.000000e+00> : vector<8x32xf32>
    %93 = tpu.matmul %91, %92, %cst_41 {dimension_numbers = #tpu.dot_dimension_numbers<[1], [0], [0], [1], [0, 0, 1, 1], [], []>} : vector<8x4xf32>, vector<4x32xf32>, vector<8x32xf32> -> vector<8x32xf32>
    %94 = arith.mulf %93, %70 : vector<8x32xf32>
    %cst_42 = arith.constant dense<0.000000e+00> : vector<32xf32>
    %95 = vector.multi_reduction <add>, %94, %cst_42 [0] : vector<8x32xf32> to vector<32xf32>
    %96 = vector.shape_cast %95 : vector<32xf32> to vector<1x32xf32>
    %97 = arith.subf %68, %96 : vector<1x32xf32>
    %c0_43 = arith.constant 0 : index
    %c0_44 = arith.constant 0 : index
    %98 = vector.load %arg6[%c0_43, %c0_44] : memref<32x32xf32, #tpu.memory_space<vmem>>, vector<32x32xf32>
    %cst_45 = arith.constant dense<0.000000e+00> : vector<1x32xf32>
    %99 = tpu.matmul %97, %98, %cst_45 {dimension_numbers = #tpu.dot_dimension_numbers<[1], [0], [0], [1], [0, 0, 1, 1], [], []>} : vector<1x32xf32>, vector<32x32xf32>, vector<1x32xf32> -> vector<1x32xf32>
    %c0_46 = arith.constant 0 : index
    %c0_47 = arith.constant 0 : index
    %100 = vector.load %arg7[%c0_46, %c0_47] : memref<1x32xf32, #tpu.memory_space<vmem>>, vector<1x32xf32>
    %101 = arith.addf %99, %100 : vector<1x32xf32>
    %cst_48 = arith.constant dense<0.000000e+00> : vector<1xf32>
    %102 = vector.multi_reduction <add>, %101, %cst_48 [1] : vector<1x32xf32> to vector<1xf32>
    %103 = vector.shape_cast %102 : vector<1xf32> to vector<1x1xf32>
    %cst_49 = arith.constant 3.200000e+01 : f32
    %104 = vector.broadcast %cst_49 : f32 to vector<1x1xf32>
    %105 = arith.divf %103, %104 : vector<1x1xf32>
    %106 = vector.broadcast %105 : vector<1x1xf32> to vector<1x32xf32>
    %107 = arith.subf %101, %106 : vector<1x32xf32>
    %108 = arith.mulf %107, %107 : vector<1x32xf32>
    %cst_50 = arith.constant dense<0.000000e+00> : vector<1xf32>
    %109 = vector.multi_reduction <add>, %108, %cst_50 [1] : vector<1x32xf32> to vector<1xf32>
    %110 = vector.shape_cast %109 : vector<1xf32> to vector<1x1xf32>
    %cst_51 = arith.constant 3.200000e+01 : f32
    %111 = vector.broadcast %cst_51 : f32 to vector<1x1xf32>
    %112 = arith.divf %110, %111 : vector<1x1xf32>
    %113 = vector.broadcast %105 : vector<1x1xf32> to vector<1x32xf32>
    %114 = arith.subf %101, %113 : vector<1x32xf32>
    %cst_52 = arith.constant 9.99999974E-6 : f32
    %115 = vector.broadcast %cst_52 : f32 to vector<1x1xf32>
    %116 = arith.addf %112, %115 : vector<1x1xf32>
    %117 = math.rsqrt %116 : vector<1x1xf32>
    %118 = vector.broadcast %117 : vector<1x1xf32> to vector<1x32xf32>
    %119 = arith.mulf %114, %118 : vector<1x32xf32>
    %c0_53 = arith.constant 0 : index
    %c0_54 = arith.constant 0 : index
    %120 = vector.load %arg8[%c0_53, %c0_54] : memref<1x32xf32, #tpu.memory_space<vmem>>, vector<1x32xf32>
    %121 = arith.mulf %119, %120 : vector<1x32xf32>
    %c0_55 = arith.constant 0 : index
    %c0_56 = arith.constant 0 : index
    %122 = vector.load %arg9[%c0_55, %c0_56] : memref<1x32xf32, #tpu.memory_space<vmem>>, vector<1x32xf32>
    %123 = arith.addf %121, %122 : vector<1x32xf32>
    %cst_57 = arith.constant 0.000000e+00 : f32
    %124 = vector.broadcast %cst_57 : f32 to vector<1x32xf32>
    %125 = arith.cmpf oge, %123, %124 : vector<1x32xf32>
    %cst_58 = arith.constant 2.000000e-02 : f32
    %126 = vector.broadcast %cst_58 : f32 to vector<1x32xf32>
    %127 = arith.mulf %126, %123 : vector<1x32xf32>
    %128 = arith.select %125, %123, %127 : vector<1x32xi1>, vector<1x32xf32>
    %129 = arith.addf %68, %128 : vector<1x32xf32>
    %130 = tpu.concatenate %67, %129 in 0 : vector<1x32xf32>, vector<1x32xf32> -> vector<2x32xf32>
    %c0_59 = arith.constant 0 : index
    %c0_60 = arith.constant 0 : index
    %c0_61 = arith.constant 0 : index
    %131 = vector.load %arg10[%c0_59, %c0_60, %c0_61] : memref<2x1x32xf32, #tpu.memory_space<vmem>>, vector<2x1x32xf32>
    %132 = vector.shape_cast %131 : vector<2x1x32xf32> to vector<2x32xf32>
    %133 = vector.shape_cast %130 : vector<2x32xf32> to vector<2x1x32xf32>
    tpu.vector_store %arg10[%c0_59, %c0_60, %c0_61], %133 {strides = array<i32>} : memref<2x1x32xf32, #tpu.memory_space<vmem>>, vector<2x1x32xf32>,
    return
  }
  func.func @transform_0(%arg0: i32) -> (i32, i32) {
    %c0_i32 = arith.constant 0 : i32
    %c0_i32_0 = arith.constant 0 : i32
    return %arg0, %c0_i32 : i32, i32
  }
  func.func @transform_1(%arg0: i32) -> (i32, i32) {
    %c0_i32 = arith.constant 0 : i32
    %c0_i32_0 = arith.constant 0 : i32
    %c0_i32_1 = arith.constant 0 : i32
    return %c0_i32, %c0_i32_0 : i32, i32
  }
  func.func @transform_2(%arg0: i32) -> (i32, i32) {
    %c0_i32 = arith.constant 0 : i32
    %c0_i32_0 = arith.constant 0 : i32
    %c0_i32_1 = arith.constant 0 : i32
    return %c0_i32, %c0_i32_0 : i32, i32
  }
  func.func @transform_3(%arg0: i32) -> (i32, i32) {
    %c0_i32 = arith.constant 0 : i32
    %c0_i32_0 = arith.constant 0 : i32
    %c0_i32_1 = arith.constant 0 : i32
    return %c0_i32, %c0_i32_0 : i32, i32
  }
  func.func @transform_4(%arg0: i32) -> (i32, i32) {
    %c0_i32 = arith.constant 0 : i32
    %c0_i32_0 = arith.constant 0 : i32
    %c0_i32_1 = arith.constant 0 : i32
    return %c0_i32, %c0_i32_0 : i32, i32
  }
  func.func @transform_5(%arg0: i32) -> (i32, i32) {
    %c0_i32 = arith.constant 0 : i32
    %c0_i32_0 = arith.constant 0 : i32
    %c0_i32_1 = arith.constant 0 : i32
    return %c0_i32, %c0_i32_0 : i32, i32
  }
  func.func @transform_6(%arg0: i32) -> (i32, i32) {
    %c0_i32 = arith.constant 0 : i32
    %c0_i32_0 = arith.constant 0 : i32
    %c0_i32_1 = arith.constant 0 : i32
    return %c0_i32, %c0_i32_0 : i32, i32
  }
  func.func @transform_7(%arg0: i32) -> (i32, i32) {
    %c0_i32 = arith.constant 0 : i32
    %c0_i32_0 = arith.constant 0 : i32
    %c0_i32_1 = arith.constant 0 : i32
    return %c0_i32, %c0_i32_0 : i32, i32
  }
  func.func @transform_8(%arg0: i32) -> (i32, i32) {
    %c0_i32 = arith.constant 0 : i32
    %c0_i32_0 = arith.constant 0 : i32
    %c0_i32_1 = arith.constant 0 : i32
    return %c0_i32, %c0_i32_0 : i32, i32
  }
  func.func @transform_9(%arg0: i32) -> (i32, i32, i32) {
    %c0_i32 = arith.constant 0 : i32
    %c0_i32_0 = arith.constant 0 : i32
    %c0_i32_1 = arith.constant 0 : i32
    return %arg0, %c0_i32, %c0_i32_0 : i32, i32, i32
  }
}

</mosaic_0001>

<llo_original>
// kernel: tpu_custom_call.1
$region0: #{tpu_custom_call.1}
  #allocation0 [shape = 'u32[]', space=smem, size = 0x4, offset = 0x4, fixed_abs, tag = 'smem constant byte address 0x4 - core index']
  #allocation1 [shape = 'u32[144,128]{1,0:T(1,128)}', space=vmem, size = 0x12000, scoped, tag = 'internal scratch']
  %s0 = inlined_call_operand.vmem [shape: f32[16,32], index: 0, kind: input, shape index: {}]
  %s1 = inlined_call_operand.hbm [shape: f32[32,384], index: 1, kind: input, shape index: {}]
  %s2 = inlined_call_operand.hbm [shape: f32[1,384], index: 2, kind: input, shape index: {}]
  %s3 = inlined_call_operand.vmem [shape: f32[32,4], index: 3, kind: input, shape index: {}]
  %s4 = inlined_call_operand.vmem [shape: f32[4,32], index: 4, kind: input, shape index: {}]
  %s5 = inlined_call_operand.vmem [shape: f32[32,32], index: 5, kind: input, shape index: {}]
  %s6 = inlined_call_operand.vmem [shape: f32[1,32], index: 6, kind: input, shape index: {}]
  %s7 = inlined_call_operand.vmem [shape: f32[1,32], index: 7, kind: input, shape index: {}]
  %s8 = inlined_call_operand.vmem [shape: f32[1,32], index: 8, kind: input, shape index: {}]
  %s9 = inlined_call_operand.hbm [shape: f32[2,1,32], index: 9, kind: output, shape index: {}]
  %s10 = sld [smem:[#allocation0]]
  $region54: #{tpu_custom_call.1} parent=0
    _
  %s12 = ssub.s32 1, %s10
  %s13 = scalar_select 0, %s12, %s10
  $region1: #{tpu_custom_call.1} parent=0
    #allocation2 [shape = 'u8[49152]{0}', space=vmem, size = 0xc000, scoped, tag = 'input window, operand 1, single buffered']
    #allocation3 [shape = 's32[1]{0}', space=sflag, size = 0x4, scoped, tag = 'scoped memory for tpu_custom_call.1']
    #allocation4 [shape = 's32[1]{0}', space=sflag, size = 0x4, scoped, tag = 'scoped memory for tpu_custom_call.1']
    #allocation5 [shape = 'u8[1536]{0}', space=vmem, size = 0x800, scoped, tag = 'input window, operand 2, single buffered']
    #allocation6 [shape = 's32[1]{0}', space=sflag, size = 0x4, scoped, tag = 'scoped memory for tpu_custom_call.1']
    #allocation7 [shape = 'u8[1024]{0}', space=vmem, size = 0x400, scoped, tag = 'output window, operand 0, single buffered']
    %14 = vsyncpa [#allocation3], 0
    %15 = vsyncpa [#allocation6], 0
    %16 = vsyncpa [#allocation4], 0
    // Predicated region
    $region2: #{tpu_custom_call.1} parent=1 // pred_check
      _
    $region3: #{tpu_custom_call.1} parent=1 // pred_check_branch
      %18 = sbr.rel (0) target = $region5
    $region4: #{tpu_custom_call.1} parent=1 // pred_region
      _
    $region5: #{tpu_custom_call.1} parent=1 // pred_fallthru
      _
    // Predicated region
    $region6: #{tpu_custom_call.1} parent=1 // pred_check
      _
    $region7: #{tpu_custom_call.1} parent=1 // pred_check_branch
      %20 = sbr.rel (0) target = $region9
    $region8: #{tpu_custom_call.1} parent=1 // pred_region
      %s22 = ssub.s32 1536, 1536
      %23 = vsyncadd [#allocation3], %s22
      %s24 = sshll.u32 [#allocation2], 4
      %s25 = int_to_ptr.vmem [resolvable:$true] %s24
      %30 = dma.hbm_to_vmem [thread:$0]  %s1, 1536, %s25, [#allocation3], 384, 384, 24
    $region9: #{tpu_custom_call.1} parent=1 // pred_fallthru
      _
    // Predicated region
    $region10: #{tpu_custom_call.1} parent=1 // pred_check
      _
    $region11: #{tpu_custom_call.1} parent=1 // pred_check_branch
      %32 = sbr.rel (0) target = $region13
    $region12: #{tpu_custom_call.1} parent=1 // pred_region
      %s34 = ssub.s32 48, 48
      %35 = vsyncadd [#allocation6], %s34
      %s37 = sshll.u32 [#allocation5], 4
      %s38 = int_to_ptr.vmem [resolvable:$true] %s37
      %40 = dma.hbm_to_vmem [thread:$0]  %s2, 48, %s38, [#allocation6]
    $region13: #{tpu_custom_call.1} parent=1 // pred_fallthru
      _
    // Predicated region
    $region14: #{tpu_custom_call.1} parent=1 // pred_check
      _
    $region15: #{tpu_custom_call.1} parent=1 // pred_check_branch
      %42 = sbr.rel (0) target = $region17
    $region16: #{tpu_custom_call.1} parent=1 // pred_region
      _
    $region17: #{tpu_custom_call.1} parent=1 // pred_fallthru
      _
    // Predicated region
    $region18: #{tpu_custom_call.1} parent=1 // pred_check
      _
    $region19: #{tpu_custom_call.1} parent=1 // pred_check_branch
      %44 = sbr.rel (0) target = $region21
    $region20: #{tpu_custom_call.1} parent=1 // pred_region
      _
    $region21: #{tpu_custom_call.1} parent=1 // pred_fallthru
      _
    // Predicated region
    $region22: #{tpu_custom_call.1} parent=1 // pred_check
      _
    $region23: #{tpu_custom_call.1} parent=1 // pred_check_branch
      %46 = sbr.rel (0) target = $region25
    $region24: #{tpu_custom_call.1} parent=1 // pred_region
      _
    $region25: #{tpu_custom_call.1} parent=1 // pred_fallthru
      _
    // Predicated region
    $region26: #{tpu_custom_call.1} parent=1 // pred_check
      _
    $region27: #{tpu_custom_call.1} parent=1 // pred_check_branch
      %48 = sbr.rel (0) target = $region29
    $region28: #{tpu_custom_call.1} parent=1 // pred_region
      _
    $region29: #{tpu_custom_call.1} parent=1 // pred_fallthru
      _
    // Predicated region
    $region30: #{tpu_custom_call.1} parent=1 // pred_check
      _
    $region31: #{tpu_custom_call.1} parent=1 // pred_check_branch
      %50 = sbr.rel (0) target = $region33
    $region32: #{tpu_custom_call.1} parent=1 // pred_region
      _
    $region33: #{tpu_custom_call.1} parent=1 // pred_fallthru
      _
    // Predicated region
    $region34: #{tpu_custom_call.1} parent=1 // pred_check
      _
    $region35: #{tpu_custom_call.1} parent=1 // pred_check_branch
      %52 = sbr.rel (0) target = $region37
    $region36: #{tpu_custom_call.1} parent=1 // pred_region
      _
    $region37: #{tpu_custom_call.1} parent=1 // pred_fallthru
      _
    // Predicated region
    $region38: #{tpu_custom_call.1} parent=1 // pred_check
      _
    $region39: #{tpu_custom_call.1} parent=1 // pred_check_branch
      %54 = sbr.rel (0) target = $region41
    $region40: #{tpu_custom_call.1} parent=1 // pred_region
      %55 = dma.done [#allocation3], 1536
    $region41: #{tpu_custom_call.1} parent=1 // pred_fallthru
      _
    // Predicated region
    $region42: #{tpu_custom_call.1} parent=1 // pred_check
      _
    $region43: #{tpu_custom_call.1} parent=1 // pred_check_branch
      %57 = sbr.rel (0) target = $region45
    $region44: #{tpu_custom_call.1} parent=1 // pred_region
      %58 = dma.done [#allocation6], 48
    $region45: #{tpu_custom_call.1} parent=1 // pred_fallthru
      _
    %v59 = vld [vmem:[%s0] sm:$0xff]
    %v60 = vld [vmem:[%s0 + $0x8] sm:$0xff]
    %v61 = vld [vmem:[#allocation2] sm:$0xff]
    %v62 = vld [vmem:[#allocation2 + $0x8] sm:$0xff]
    %v63 = vld [vmem:[#allocation2 + $0x10] sm:$0xff]
    %v64 = vld [vmem:[#allocation2 + $0x18] sm:$0xff]
    %v65 = vld [vmem:[#allocation2 + $0x20] sm:$0xff]
    %v66 = vld [vmem:[#allocation2 + $0x28] sm:$0xff]
    %v67 = vld [vmem:[#allocation2 + $0x30] sm:$0xff]
    %v68 = vld [vmem:[#allocation2 + $0x38] sm:$0xff]
    %v69 = vld [vmem:[#allocation2 + $0x40] sm:$0xff]
    %v70 = vld [vmem:[#allocation2 + $0x48] sm:$0xff]
    %v71 = vld [vmem:[#allocation2 + $0x50] sm:$0xff]
    %v72 = vld [vmem:[#allocation2 + $0x58] sm:$0xff]
    %v73 = vld [vmem:[#allocation5] sm:$0x7]
    %v75 = vlaneseq
    %v76 = vshrl.u32 %v75, 7
    %v77 = vsub.s32 0, %v76
    %v78 = vrot.slane %v73, %v77
    %v79 = vlaneseq
    %v80 = vshrl.u32 %v79, 7
    %v81 = vsub.s32 1, %v80
    %v82 = vrot.slane %v73, %v81
    %v83 = vlaneseq
    %v84 = vshrl.u32 %v83, 7
    %v85 = vsub.s32 2, %v84
    %v86 = vrot.slane %v73, %v85
    %vm90 = vcmask 261120
    %v92 = vsel %vm90, %v59, 0
    %v95 = vsel %vm90, %v60, 0
    %97 = vmatprep.subr.mxu0 %v62
    %98 = vmatpush1.msra.mxu0 %v61
    %99 = vmatprep.subr.mxu0 %v65
    %100 = vmatpush1.msra.mxu0 %v64
    %101 = vmatprep.subr.mxu0 %v68
    %102 = vmatpush1.msra.mxu0 %v67
    %103 = vmatprep.subr.mxu0 %v71
    %104 = vmatpush1.msra.mxu0 %v70
    %105 = vmatprep.subr.mxu0 0.0
    %106 = vmatpush1.msra.mxu0 0.0
    %107 = vmatprep.subr.mxu0 0.0
    %108 = vmatpush1.msra.mxu0 0.0
    %109 = vmatprep.subr.mxu0 0.0
    %110 = vmatpush1.msra.mxu0 0.0
    %111 = vmatprep.subr.mxu0 0.0
    %112 = vmatpush1.msra.mxu0 0.0
    %113 = vmatprep.subr.mxu0 0.0
    %114 = vmatpush1.msra.mxu0 0.0
    %115 = vmatprep.subr.mxu0 0.0
    %116 = vmatpush1.msra.mxu0 0.0
    %117 = vmatprep.subr.mxu0 0.0
    %118 = vmatpush1.msra.mxu0 0.0
    %119 = vmatprep.subr.mxu0 0.0
    %120 = vmatpush1.msra.mxu0 0.0
    %121 = vmatprep.subr.mxu0 0.0
    %122 = vmatpush1.msra.mxu0 0.0
    %123 = vmatprep.subr.mxu0 0.0
    %124 = vmatpush1.msra.mxu0 0.0
    %125 = vmatprep.subr.mxu0 0.0
    %126 = vmatpush1.msra.mxu0 0.0
    %127 = vmatprep.subr.mxu0 0.0
    %128 = vmatpush1.msra.mxu0 0.0
    %129 = vmatprep.subr.mxu0 0.0
    %130 = vmatpush1.msra.mxu0 0.0
    %131 = vmatprep.subr.mxu0 0.0
    %132 = vmatpush1.msra.mxu0 0.0
    %133 = vmatprep.subr.mxu0 0.0
    %134 = vmatpush1.msra.mxu0 0.0
    %135 = vmatprep.subr.mxu0 0.0
    %136 = vmatpush1.msra.mxu0 0.0
    %137 = vmatprep.subr.mxu0 0.0
    %138 = vmatpush1.msra.mxu0 0.0
    %139 = vmatprep.subr.mxu0 0.0
    %140 = vmatpush1.msra.mxu0 0.0
    %141 = vmatprep.subr.mxu0 0.0
    %142 = vmatpush1.msra.mxu0 0.0
    %143 = vmatprep.subr.mxu0 0.0
    %144 = vmatpush1.msra.mxu0 0.0
    %145 = vmatprep.subr.mxu0 0.0
    %146 = vmatpush1.msra.mxu0 0.0
    %147 = vmatprep.subr.mxu0 0.0
    %148 = vmatpush1.msra.mxu0 0.0
    %149 = vmatprep.subr.mxu0 0.0
    %150 = vmatpush1.msra.mxu0 0.0
    %151 = vmatprep.subr.mxu0 0.0
    %152 = vmatpush1.msra.mxu0 0.0
    %153 = vmatprep.subr.mxu0 0.0
    %154 = vmatpush1.msra.mxu0 0.0
    %155 = vmatprep.subr.mxu0 0.0
    %156 = vmatpush1.msra.mxu0 0.0
    %157 = vmatprep.subr.mxu0 0.0
    %158 = vmatpush1.msra.mxu0 0.0
    %159 = vmatprep.subr.mxu0 0.0
    %160 = vmatpush1.msra.mxu0 0.0
    %161 = vmatprep.mubr.f32.mxu0 0.0
    %162 = vmatmul.mubr.f32.gmra.mrb[0].mxu0 %v92
    %v163 = vpop.f32.mrb[0].mxu0
    %v164 = vadd.f32 %v78, %v163
    %v165 = vpop.f32.mrb[0].mxu0
    %v166 = vadd.f32 %v82, %v165
    %167 = vmatprep.mubr.f32.mxu0 0.0
    %168 = vmatmul.mubr.f32.gmra.mrb[0].mxu0 %v95
    %v169 = vpop.f32.mrb[0].mxu0
    %v170 = vadd.f32 %v78, %v169
    %v171 = vpop.f32.mrb[0].mxu0
    %v172 = vadd.f32 %v82, %v171
    %173 = vdwg.mxu0
    %174 = vmatprep.subr.mxu0 0.0
    %175 = vmatpush1.msra.mxu0 %v63
    %176 = vmatprep.subr.mxu0 0.0
    %177 = vmatpush1.msra.mxu0 %v66
    %178 = vmatprep.subr.mxu0 0.0
    %179 = vmatpush1.msra.mxu0 %v69
    %180 = vmatprep.subr.mxu0 0.0
    %181 = vmatpush1.msra.mxu0 %v72
    %182 = vmatprep.subr.mxu0 0.0
    %183 = vmatpush1.msra.mxu0 0.0
    %184 = vmatprep.subr.mxu0 0.0
    %185 = vmatpush1.msra.mxu0 0.0
    %186 = vmatprep.subr.mxu0 0.0
    %187 = vmatpush1.msra.mxu0 0.0
    %188 = vmatprep.subr.mxu0 0.0
    %189 = vmatpush1.msra.mxu0 0.0
    %190 = vmatprep.subr.mxu0 0.0
    %191 = vmatpush1.msra.mxu0 0.0
    %192 = vmatprep.subr.mxu0 0.0
    %193 = vmatpush1.msra.mxu0 0.0
    %194 = vmatprep.subr.mxu0 0.0
    %195 = vmatpush1.msra.mxu0 0.0
    %196 = vmatprep.subr.mxu0 0.0
    %197 = vmatpush1.msra.mxu0 0.0
    %198 = vmatprep.subr.mxu0 0.0
    %199 = vmatpush1.msra.mxu0 0.0
    %200 = vmatprep.subr.mxu0 0.0
    %201 = vmatpush1.msra.mxu0 0.0
    %202 = vmatprep.subr.mxu0 0.0
    %203 = vmatpush1.msra.mxu0 0.0
    %204 = vmatprep.subr.mxu0 0.0
    %205 = vmatpush1.msra.mxu0 0.0
    %206 = vmatprep.subr.mxu0 0.0
    %207 = vmatpush1.msra.mxu0 0.0
    %208 = vmatprep.subr.mxu0 0.0
    %209 = vmatpush1.msra.mxu0 0.0
    %210 = vmatprep.subr.mxu0 0.0
    %211 = vmatpush1.msra.mxu0 0.0
    %212 = vmatprep.subr.mxu0 0.0
    %213 = vmatpush1.msra.mxu0 0.0
    %214 = vmatprep.subr.mxu0 0.0
    %215 = vmatpush1.msra.mxu0 0.0
    %216 = vmatprep.subr.mxu0 0.0
    %217 = vmatpush1.msra.mxu0 0.0
    %218 = vmatprep.subr.mxu0 0.0
    %219 = vmatpush1.msra.mxu0 0.0
    %220 = vmatprep.subr.mxu0 0.0
    %221 = vmatpush1.msra.mxu0 0.0
    %222 = vmatprep.subr.mxu0 0.0
    %223 = vmatpush1.msra.mxu0 0.0
    %224 = vmatprep.subr.mxu0 0.0
    %225 = vmatpush1.msra.mxu0 0.0
    %226 = vmatprep.subr.mxu0 0.0
    %227 = vmatpush1.msra.mxu0 0.0
    %228 = vmatprep.subr.mxu0 0.0
    %229 = vmatpush1.msra.mxu0 0.0
    %230 = vmatprep.subr.mxu0 0.0
    %231 = vmatpush1.msra.mxu0 0.0
    %232 = vmatprep.subr.mxu0 0.0
    %233 = vmatpush1.msra.mxu0 0.0
    %234 = vmatprep.subr.mxu0 0.0
    %235 = vmatpush1.msra.mxu0 0.0
    %236 = vmatprep.subr.mxu0 0.0
    %237 = vmatpush1.msra.mxu0 0.0
    %238 = vmatprep.mubr.f32.mxu0 0.0
    %239 = vmatmul.mubr.f32.gmra.mrb[0].mxu0 %v92
    %v240 = vpop.f32.mrb[0].mxu0
    %v241 = vadd.f32 %v86, %v240
    %v242 = vpop.f32.mrb[0].mxu0
    %243 = vmatprep.mubr.f32.mxu0 0.0
    %244 = vmatmul.mubr.f32.gmra.mrb[0].mxu0 %v95
    %v245 = vpop.f32.mrb[0].mxu0
    %v246 = vadd.f32 %v86, %v245
    %v247 = vpop.f32.mrb[0].mxu0
    %248 = vdwg.mxu0
    %v249 = vlaneseq
    %v250 = vshrl.u32 %v249, 7
    %v251 = vsub.s32 0, %v250
    %v252 = vrot.slane %v164, %v251
    %v253 = vmul.f32 %v166, %v252
    %v254 = vld [vmem:[%s3] sm:$0xff]
    %v255 = vld [vmem:[%s3 + $0x8] sm:$0xff]
    %v256 = vld [vmem:[%s3 + $0x10] sm:$0xff]
    %v257 = vld [vmem:[%s3 + $0x18] sm:$0xff]
    %v259 = vsel %vm90, %v253, 0
    %261 = vmatprep.subr.mxu0 0.0
    %262 = vmatpush1.msra.mxu0 %v254
    %263 = vmatprep.subr.mxu0 0.0
    %264 = vmatpush1.msra.mxu0 %v255
    %265 = vmatprep.subr.mxu0 0.0
    %266 = vmatpush1.msra.mxu0 %v256
    %267 = vmatprep.subr.mxu0 0.0
    %268 = vmatpush1.msra.mxu0 %v257
    %269 = vmatprep.subr.mxu0 0.0
    %270 = vmatpush1.msra.mxu0 0.0
    %271 = vmatprep.subr.mxu0 0.0
    %272 = vmatpush1.msra.mxu0 0.0
    %273 = vmatprep.subr.mxu0 0.0
    %274 = vmatpush1.msra.mxu0 0.0
    %275 = vmatprep.subr.mxu0 0.0
    %276 = vmatpush1.msra.mxu0 0.0
    %277 = vmatprep.subr.mxu0 0.0
    %278 = vmatpush1.msra.mxu0 0.0
    %279 = vmatprep.subr.mxu0 0.0
    %280 = vmatpush1.msra.mxu0 0.0
    %281 = vmatprep.subr.mxu0 0.0
    %282 = vmatpush1.msra.mxu0 0.0
    %283 = vmatprep.subr.mxu0 0.0
    %284 = vmatpush1.msra.mxu0 0.0
    %285 = vmatprep.subr.mxu0 0.0
    %286 = vmatpush1.msra.mxu0 0.0
    %287 = vmatprep.subr.mxu0 0.0
    %288 = vmatpush1.msra.mxu0 0.0
    %289 = vmatprep.subr.mxu0 0.0
    %290 = vmatpush1.msra.mxu0 0.0
    %291 = vmatprep.subr.mxu0 0.0
    %292 = vmatpush1.msra.mxu0 0.0
    %293 = vmatprep.subr.mxu0 0.0
    %294 = vmatpush1.msra.mxu0 0.0
    %295 = vmatprep.subr.mxu0 0.0
    %296 = vmatpush1.msra.mxu0 0.0
    %297 = vmatprep.subr.mxu0 0.0
    %298 = vmatpush1.msra.mxu0 0.0
    %299 = vmatprep.subr.mxu0 0.0
    %300 = vmatpush1.msra.mxu0 0.0
    %301 = vmatprep.subr.mxu0 0.0
    %302 = vmatpush1.msra.mxu0 0.0
    %303 = vmatprep.subr.mxu0 0.0
    %304 = vmatpush1.msra.mxu0 0.0
    %305 = vmatprep.subr.mxu0 0.0
    %306 = vmatpush1.msra.mxu0 0.0
    %307 = vmatprep.subr.mxu0 0.0
    %308 = vmatpush1.msra.mxu0 0.0
    %309 = vmatprep.subr.mxu0 0.0
    %310 = vmatpush1.msra.mxu0 0.0
    %311 = vmatprep.subr.mxu0 0.0
    %312 = vmatpush1.msra.mxu0 0.0
    %313 = vmatprep.subr.mxu0 0.0
    %314 = vmatpush1.msra.mxu0 0.0
    %315 = vmatprep.subr.mxu0 0.0
    %316 = vmatpush1.msra.mxu0 0.0
    %317 = vmatprep.subr.mxu0 0.0
    %318 = vmatpush1.msra.mxu0 0.0
    %319 = vmatprep.subr.mxu0 0.0
    %320 = vmatpush1.msra.mxu0 0.0
    %321 = vmatprep.subr.mxu0 0.0
    %322 = vmatpush1.msra.mxu0 0.0
    %323 = vmatprep.subr.mxu0 0.0
    %324 = vmatpush1.msra.mxu0 0.0
    %325 = vmatprep.mubr.f32.mxu0 0.0
    %326 = vmatmul.mubr.f32.gmra.mrb[0].mxu0 %v259
    %v327 = vpop.f32.mrb[0].mxu0
    %v328 = vadd.f32 0.0, %v327
    %v329 = vpop.f32.mrb[0].mxu0
    %330 = vdwg.mxu0
    %vm331 = vcmask 31744
    %v332 = vsel %vm331, %v328, -inf
    %v333 = vrot.slane %v332, 4
    %v334 = vmax.f32 %v332, %v333
    %v335 = vrot.slane %v334, 2
    %v336 = vmax.f32 %v334, %v335
    %v337 = vrot.slane %v336, 1
    %v338 = vmax.f32 %v336, %v337
    %v339 = vsub.f32 %v328, %v338
    %v340 = vmul.f32 %v339, 1.442695
    %v341 = vpow.pop %v340
    %v342 = vsel %vm331, %v341, 0.0
    %v343 = vrot.slane %v342, 4
    %v344 = vadd.f32 %v342, %v343
    %v345 = vrot.slane %v344, 2
    %v346 = vadd.f32 %v344, %v345
    %v347 = vrot.slane %v346, 1
    %v348 = vadd.f32 %v346, %v347
    %v349 = vrcp.pop %v348
    %v350 = vmul.f32 %v341, %v349
    %v351 = vsel %vm331, %v350, 0.0
    %352 = vadd.xlane.f32.xlu0 %v351
    %v353 = vpop.xlane.xlu0 %352
    %v354 = vadd.f32 %v353, 1e-09
    %v355 = vrcp.pop %v354
    %v356 = vmul.f32 %v350, %v355
    %v357 = vld [vmem:[%s4] sm:$0xf]
    %v359 = vsel %vm331, %v356, 0
    %vm361 = vcmask 1043456
    %v363 = vsel %vm361, %v357, 0
    %365 = vmatprep.subr.mxu0 0.0
    %366 = vmatpush1.msra.mxu0 %v363
    %367 = vmatprep.subr.mxu0 0.0
    %368 = vmatpush1.msra.mxu0 0.0
    %369 = vmatprep.subr.mxu0 0.0
    %370 = vmatpush1.msra.mxu0 0.0
    %371 = vmatprep.subr.mxu0 0.0
    %372 = vmatpush1.msra.mxu0 0.0
    %373 = vmatprep.subr.mxu0 0.0
    %374 = vmatpush1.msra.mxu0 0.0
    %375 = vmatprep.subr.mxu0 0.0
    %376 = vmatpush1.msra.mxu0 0.0
    %377 = vmatprep.subr.mxu0 0.0
    %378 = vmatpush1.msra.mxu0 0.0
    %379 = vmatprep.subr.mxu0 0.0
    %380 = vmatpush1.msra.mxu0 0.0
    %381 = vmatprep.subr.mxu0 0.0
    %382 = vmatpush1.msra.mxu0 0.0
    %383 = vmatprep.subr.mxu0 0.0
    %384 = vmatpush1.msra.mxu0 0.0
    %385 = vmatprep.subr.mxu0 0.0
    %386 = vmatpush1.msra.mxu0 0.0
    %387 = vmatprep.subr.mxu0 0.0
    %388 = vmatpush1.msra.mxu0 0.0
    %389 = vmatprep.subr.mxu0 0.0
    %390 = vmatpush1.msra.mxu0 0.0
    %391 = vmatprep.subr.mxu0 0.0
    %392 = vmatpush1.msra.mxu0 0.0
    %393 = vmatprep.subr.mxu0 0.0
    %394 = vmatpush1.msra.mxu0 0.0
    %395 = vmatprep.subr.mxu0 0.0
    %396 = vmatpush1.msra.mxu0 0.0
    %397 = vmatprep.subr.mxu0 0.0
    %398 = vmatpush1.msra.mxu0 0.0
    %399 = vmatprep.subr.mxu0 0.0
    %400 = vmatpush1.msra.mxu0 0.0
    %401 = vmatprep.subr.mxu0 0.0
    %402 = vmatpush1.msra.mxu0 0.0
    %403 = vmatprep.subr.mxu0 0.0
    %404 = vmatpush1.msra.mxu0 0.0
    %405 = vmatprep.subr.mxu0 0.0
    %406 = vmatpush1.msra.mxu0 0.0
    %407 = vmatprep.subr.mxu0 0.0
    %408 = vmatpush1.msra.mxu0 0.0
    %409 = vmatprep.subr.mxu0 0.0
    %410 = vmatpush1.msra.mxu0 0.0
    %411 = vmatprep.subr.mxu0 0.0
    %412 = vmatpush1.msra.mxu0 0.0
    %413 = vmatprep.subr.mxu0 0.0
    %414 = vmatpush1.msra.mxu0 0.0
    %415 = vmatprep.subr.mxu0 0.0
    %416 = vmatpush1.msra.mxu0 0.0
    %417 = vmatprep.subr.mxu0 0.0
    %418 = vmatpush1.msra.mxu0 0.0
    %419 = vmatprep.subr.mxu0 0.0
    %420 = vmatpush1.msra.mxu0 0.0
    %421 = vmatprep.subr.mxu0 0.0
    %422 = vmatpush1.msra.mxu0 0.0
    %423 = vmatprep.subr.mxu0 0.0
    %424 = vmatpush1.msra.mxu0 0.0
    %425 = vmatprep.subr.mxu0 0.0
    %426 = vmatpush1.msra.mxu0 0.0
    %427 = vmatprep.subr.mxu0 0.0
    %428 = vmatpush1.msra.mxu0 0.0
    %429 = vmatprep.mubr.f32.mxu0 0.0
    %430 = vmatmul.mubr.f32.gmra.mrb[0].mxu0 %v359
    %v431 = vpop.f32.mrb[0].mxu0
    %v432 = vadd.f32 0.0, %v431
    %v433 = vpop.f32.mrb[0].mxu0
    %434 = vdwg.mxu0
    %v435 = vmul.f32 %v432, %v241
    %v436 = vsel %vm90, %v435, 0.0
    %v437 = vrot.slane %v436, 4
    %v438 = vadd.f32 %v436, %v437
    %v439 = vrot.slane %v438, 2
    %v440 = vadd.f32 %v438, %v439
    %v441 = vrot.slane %v440, 1
    %v442 = vadd.f32 %v440, %v441
    %v443 = vsub.f32 %v164, %v442
    %v444 = vld [vmem:[%s5] sm:$0xff]
    %v445 = vld [vmem:[%s5 + $0x8] sm:$0xff]
    %v446 = vld [vmem:[%s5 + $0x10] sm:$0xff]
    %v447 = vld [vmem:[%s5 + $0x18] sm:$0xff]
    %v448 = vld [vmem:[%s6] sm:$0x1]
    %v450 = vsel %vm90, %v443, 0
    %452 = vmatprep.subr.mxu0 0.0
    %453 = vmatpush1.msra.mxu0 %v444
    %454 = vmatprep.subr.mxu0 0.0
    %455 = vmatpush1.msra.mxu0 %v445
    %456 = vmatprep.subr.mxu0 0.0
    %457 = vmatpush1.msra.mxu0 %v446
    %458 = vmatprep.subr.mxu0 0.0
    %459 = vmatpush1.msra.mxu0 %v447
    %460 = vmatprep.subr.mxu0 0.0
    %461 = vmatpush1.msra.mxu0 0.0
    %462 = vmatprep.subr.mxu0 0.0
    %463 = vmatpush1.msra.mxu0 0.0
    %464 = vmatprep.subr.mxu0 0.0
    %465 = vmatpush1.msra.mxu0 0.0
    %466 = vmatprep.subr.mxu0 0.0
    %467 = vmatpush1.msra.mxu0 0.0
    %468 = vmatprep.subr.mxu0 0.0
    %469 = vmatpush1.msra.mxu0 0.0
    %470 = vmatprep.subr.mxu0 0.0
    %471 = vmatpush1.msra.mxu0 0.0
    %472 = vmatprep.subr.mxu0 0.0
    %473 = vmatpush1.msra.mxu0 0.0
    %474 = vmatprep.subr.mxu0 0.0
    %475 = vmatpush1.msra.mxu0 0.0
    %476 = vmatprep.subr.mxu0 0.0
    %477 = vmatpush1.msra.mxu0 0.0
    %478 = vmatprep.subr.mxu0 0.0
    %479 = vmatpush1.msra.mxu0 0.0
    %480 = vmatprep.subr.mxu0 0.0
    %481 = vmatpush1.msra.mxu0 0.0
    %482 = vmatprep.subr.mxu0 0.0
    %483 = vmatpush1.msra.mxu0 0.0
    %484 = vmatprep.subr.mxu0 0.0
    %485 = vmatpush1.msra.mxu0 0.0
    %486 = vmatprep.subr.mxu0 0.0
    %487 = vmatpush1.msra.mxu0 0.0
    %488 = vmatprep.subr.mxu0 0.0
    %489 = vmatpush1.msra.mxu0 0.0
    %490 = vmatprep.subr.mxu0 0.0
    %491 = vmatpush1.msra.mxu0 0.0
    %492 = vmatprep.subr.mxu0 0.0
    %493 = vmatpush1.msra.mxu0 0.0
    %494 = vmatprep.subr.mxu0 0.0
    %495 = vmatpush1.msra.mxu0 0.0
    %496 = vmatprep.subr.mxu0 0.0
    %497 = vmatpush1.msra.mxu0 0.0
    %498 = vmatprep.subr.mxu0 0.0
    %499 = vmatpush1.msra.mxu0 0.0
    %500 = vmatprep.subr.mxu0 0.0
    %501 = vmatpush1.msra.mxu0 0.0
    %502 = vmatprep.subr.mxu0 0.0
    %503 = vmatpush1.msra.mxu0 0.0
    %504 = vmatprep.subr.mxu0 0.0
    %505 = vmatpush1.msra.mxu0 0.0
    %506 = vmatprep.subr.mxu0 0.0
    %507 = vmatpush1.msra.mxu0 0.0
    %508 = vmatprep.subr.mxu0 0.0
    %509 = vmatpush1.msra.mxu0 0.0
    %510 = vmatprep.subr.mxu0 0.0
    %511 = vmatpush1.msra.mxu0 0.0
    %512 = vmatprep.subr.mxu0 0.0
    %513 = vmatpush1.msra.mxu0 0.0
    %514 = vmatprep.subr.mxu0 0.0
    %515 = vmatpush1.msra.mxu0 0.0
    %516 = vmatprep.mubr.f32.mxu0 0.0
    %517 = vmatmul.mubr.f32.gmra.mrb[0].mxu0 %v450
    %v518 = vpop.f32.mrb[0].mxu0
    %v519 = vadd.f32 %v448, %v518
    %v520 = vpop.f32.mrb[0].mxu0
    %521 = vdwg.mxu0
    %vm522 = vcmask 253952
    %v523 = vsel %vm522, %v519, 0.0
    %524 = vadd.xlane.f32.xlu0 %v523
    %v525 = vpop.xlane.xlu0 %524
    %v526 = vrcp.pop 32.0
    %v527 = vmul.f32 %v525, %v526
    %v528 = vsub.f32 %v519, %v527
    %v529 = vmul.f32 %v528, %v528
    %v530 = vsel %vm522, %v529, 0.0
    %531 = vadd.xlane.f32.xlu0 %v530
    %v532 = vpop.xlane.xlu0 %531
    %v533 = vmul.f32 %v532, %v526
    %v534 = vadd.f32 %v533, 1e-05
    %v535 = vrsqrt.pop %v534
    %v536 = vmul.f32 %v528, %v535
    %v537 = vld [vmem:[%s7] sm:$0x1]
    %v538 = vmul.f32 %v536, %v537
    %v539 = vld [vmem:[%s8] sm:$0x1]
    %v540 = vadd.f32 %v538, %v539
    %vm541 = vcmp.ge.f32.partialorder %v540, 0.0
    %v542 = vmul.f32 %v540, 0.02
    %v543 = vsel %vm541, %v540, %v542
    %v544 = vadd.f32 %v164, %v543
    %v545 = vlaneseq
    %v546 = vshrl.u32 %v545, 7
    %v547 = vsub.s32 0, %v546
    %v548 = vrot.slane %v170, %v547
    %v549 = vmul.f32 %v172, %v548
    %v551 = vsel %vm90, %v549, 0
    %553 = vmatprep.subr.mxu0 0.0
    %554 = vmatpush1.msra.mxu0 %v254
    %555 = vmatprep.subr.mxu0 0.0
    %556 = vmatpush1.msra.mxu0 %v255
    %557 = vmatprep.subr.mxu0 0.0
    %558 = vmatpush1.msra.mxu0 %v256
    %559 = vmatprep.subr.mxu0 0.0
    %560 = vmatpush1.msra.mxu0 %v257
    %561 = vmatprep.subr.mxu0 0.0
    %562 = vmatpush1.msra.mxu0 0.0
    %563 = vmatprep.subr.mxu0 0.0
    %564 = vmatpush1.msra.mxu0 0.0
    %565 = vmatprep.subr.mxu0 0.0
    %566 = vmatpush1.msra.mxu0 0.0
    %567 = vmatprep.subr.mxu0 0.0
    %568 = vmatpush1.msra.mxu0 0.0
    %569 = vmatprep.subr.mxu0 0.0
    %570 = vmatpush1.msra.mxu0 0.0
    %571 = vmatprep.subr.mxu0 0.0
    %572 = vmatpush1.msra.mxu0 0.0
    %573 = vmatprep.subr.mxu0 0.0
    %574 = vmatpush1.msra.mxu0 0.0
    %575 = vmatprep.subr.mxu0 0.0
    %576 = vmatpush1.msra.mxu0 0.0
    %577 = vmatprep.subr.mxu0 0.0
    %578 = vmatpush1.msra.mxu0 0.0
    %579 = vmatprep.subr.mxu0 0.0
    %580 = vmatpush1.msra.mxu0 0.0
    %581 = vmatprep.subr.mxu0 0.0
    %582 = vmatpush1.msra.mxu0 0.0
    %583 = vmatprep.subr.mxu0 0.0
    %584 = vmatpush1.msra.mxu0 0.0
    %585 = vmatprep.subr.mxu0 0.0
    %586 = vmatpush1.msra.mxu0 0.0
    %587 = vmatprep.subr.mxu0 0.0
    %588 = vmatpush1.msra.mxu0 0.0
    %589 = vmatprep.subr.mxu0 0.0
    %590 = vmatpush1.msra.mxu0 0.0
    %591 = vmatprep.subr.mxu0 0.0
    %592 = vmatpush1.msra.mxu0 0.0
    %593 = vmatprep.subr.mxu0 0.0
    %594 = vmatpush1.msra.mxu0 0.0
    %595 = vmatprep.subr.mxu0 0.0
    %596 = vmatpush1.msra.mxu0 0.0
    %597 = vmatprep.subr.mxu0 0.0
    %598 = vmatpush1.msra.mxu0 0.0
    %599 = vmatprep.subr.mxu0 0.0
    %600 = vmatpush1.msra.mxu0 0.0
    %601 = vmatprep.subr.mxu0 0.0
    %602 = vmatpush1.msra.mxu0 0.0
    %603 = vmatprep.subr.mxu0 0.0
    %604 = vmatpush1.msra.mxu0 0.0
    %605 = vmatprep.subr.mxu0 0.0
    %606 = vmatpush1.msra.mxu0 0.0
    %607 = vmatprep.subr.mxu0 0.0
    %608 = vmatpush1.msra.mxu0 0.0
    %609 = vmatprep.subr.mxu0 0.0
    %610 = vmatpush1.msra.mxu0 0.0
    %611 = vmatprep.subr.mxu0 0.0
    %612 = vmatpush1.msra.mxu0 0.0
    %613 = vmatprep.subr.mxu0 0.0
    %614 = vmatpush1.msra.mxu0 0.0
    %615 = vmatprep.subr.mxu0 0.0
    %616 = vmatpush1.msra.mxu0 0.0
    %617 = vmatprep.mubr.f32.mxu0 0.0
    %618 = vmatmul.mubr.f32.gmra.mrb[0].mxu0 %v551
    %v619 = vpop.f32.mrb[0].mxu0
    %v620 = vadd.f32 0.0, %v619
    %v621 = vpop.f32.mrb[0].mxu0
    %622 = vdwg.mxu0
    %v623 = vsel %vm331, %v620, -inf
    %v624 = vrot.slane %v623, 4
    %v625 = vmax.f32 %v623, %v624
    %v626 = vrot.slane %v625, 2
    %v627 = vmax.f32 %v625, %v626
    %v628 = vrot.slane %v627, 1
    %v629 = vmax.f32 %v627, %v628
    %v630 = vsub.f32 %v620, %v629
    %v631 = vmul.f32 %v630, 1.442695
    %v632 = vpow.pop %v631
    %v633 = vsel %vm331, %v632, 0.0
    %v634 = vrot.slane %v633, 4
    %v635 = vadd.f32 %v633, %v634
    %v636 = vrot.slane %v635, 2
    %v637 = vadd.f32 %v635, %v636
    %v638 = vrot.slane %v637, 1
    %v639 = vadd.f32 %v637, %v638
    %v640 = vrcp.pop %v639
    %v641 = vmul.f32 %v632, %v640
    %v642 = vsel %vm331, %v641, 0.0
    %643 = vadd.xlane.f32.xlu0 %v642
    %v644 = vpop.xlane.xlu0 %643
    %v645 = vadd.f32 %v644, 1e-09
    %v646 = vrcp.pop %v645
    %v647 = vmul.f32 %v641, %v646
    %v649 = vsel %vm331, %v647, 0
    %651 = vmatprep.subr.mxu0 0.0
    %652 = vmatpush1.msra.mxu0 %v363
    %653 = vmatprep.subr.mxu0 0.0
    %654 = vmatpush1.msra.mxu0 0.0
    %655 = vmatprep.subr.mxu0 0.0
    %656 = vmatpush1.msra.mxu0 0.0
    %657 = vmatprep.subr.mxu0 0.0
    %658 = vmatpush1.msra.mxu0 0.0
    %659 = vmatprep.subr.mxu0 0.0
    %660 = vmatpush1.msra.mxu0 0.0
    %661 = vmatprep.subr.mxu0 0.0
    %662 = vmatpush1.msra.mxu0 0.0
    %663 = vmatprep.subr.mxu0 0.0
    %664 = vmatpush1.msra.mxu0 0.0
    %665 = vmatprep.subr.mxu0 0.0
    %666 = vmatpush1.msra.mxu0 0.0
    %667 = vmatprep.subr.mxu0 0.0
    %668 = vmatpush1.msra.mxu0 0.0
    %669 = vmatprep.subr.mxu0 0.0
    %670 = vmatpush1.msra.mxu0 0.0
    %671 = vmatprep.subr.mxu0 0.0
    %672 = vmatpush1.msra.mxu0 0.0
    %673 = vmatprep.subr.mxu0 0.0
    %674 = vmatpush1.msra.mxu0 0.0
    %675 = vmatprep.subr.mxu0 0.0
    %676 = vmatpush1.msra.mxu0 0.0
    %677 = vmatprep.subr.mxu0 0.0
    %678 = vmatpush1.msra.mxu0 0.0
    %679 = vmatprep.subr.mxu0 0.0
    %680 = vmatpush1.msra.mxu0 0.0
    %681 = vmatprep.subr.mxu0 0.0
    %682 = vmatpush1.msra.mxu0 0.0
    %683 = vmatprep.subr.mxu0 0.0
    %684 = vmatpush1.msra.mxu0 0.0
    %685 = vmatprep.subr.mxu0 0.0
    %686 = vmatpush1.msra.mxu0 0.0
    %687 = vmatprep.subr.mxu0 0.0
    %688 = vmatpush1.msra.mxu0 0.0
    %689 = vmatprep.subr.mxu0 0.0
    %690 = vmatpush1.msra.mxu0 0.0
    %691 = vmatprep.subr.mxu0 0.0
    %692 = vmatpush1.msra.mxu0 0.0
    %693 = vmatprep.subr.mxu0 0.0
    %694 = vmatpush1.msra.mxu0 0.0
    %695 = vmatprep.subr.mxu0 0.0
    %696 = vmatpush1.msra.mxu0 0.0
    %697 = vmatprep.subr.mxu0 0.0
    %698 = vmatpush1.msra.mxu0 0.0
    %699 = vmatprep.subr.mxu0 0.0
    %700 = vmatpush1.msra.mxu0 0.0
    %701 = vmatprep.subr.mxu0 0.0
    %702 = vmatpush1.msra.mxu0 0.0
    %703 = vmatprep.subr.mxu0 0.0
    %704 = vmatpush1.msra.mxu0 0.0
    %705 = vmatprep.subr.mxu0 0.0
    %706 = vmatpush1.msra.mxu0 0.0
    %707 = vmatprep.subr.mxu0 0.0
    %708 = vmatpush1.msra.mxu0 0.0
    %709 = vmatprep.subr.mxu0 0.0
    %710 = vmatpush1.msra.mxu0 0.0
    %711 = vmatprep.subr.mxu0 0.0
    %712 = vmatpush1.msra.mxu0 0.0
    %713 = vmatprep.subr.mxu0 0.0
    %714 = vmatpush1.msra.mxu0 0.0
    %715 = vmatprep.mubr.f32.mxu0 0.0
    %716 = vmatmul.mubr.f32.gmra.mrb[0].mxu0 %v649
    %v717 = vpop.f32.mrb[0].mxu0
    %v718 = vadd.f32 0.0, %v717
    %v719 = vpop.f32.mrb[0].mxu0
    %720 = vdwg.mxu0
    %v721 = vmul.f32 %v718, %v246
    %v722 = vsel %vm90, %v721, 0.0
    %v723 = vrot.slane %v722, 4
    %v724 = vadd.f32 %v722, %v723
    %v725 = vrot.slane %v724, 2
    %v726 = vadd.f32 %v724, %v725
    %v727 = vrot.slane %v726, 1
    %v728 = vadd.f32 %v726, %v727
    %v729 = vsub.f32 %v170, %v728
    %v731 = vsel %vm90, %v729, 0
    %733 = vmatprep.subr.mxu0 0.0
    %734 = vmatpush1.msra.mxu0 %v444
    %735 = vmatprep.subr.mxu0 0.0
    %736 = vmatpush1.msra.mxu0 %v445
    %737 = vmatprep.subr.mxu0 0.0
    %738 = vmatpush1.msra.mxu0 %v446
    %739 = vmatprep.subr.mxu0 0.0
    %740 = vmatpush1.msra.mxu0 %v447
    %741 = vmatprep.subr.mxu0 0.0
    %742 = vmatpush1.msra.mxu0 0.0
    %743 = vmatprep.subr.mxu0 0.0
    %744 = vmatpush1.msra.mxu0 0.0
    %745 = vmatprep.subr.mxu0 0.0
    %746 = vmatpush1.msra.mxu0 0.0
    %747 = vmatprep.subr.mxu0 0.0
    %748 = vmatpush1.msra.mxu0 0.0
    %749 = vmatprep.subr.mxu0 0.0
    %750 = vmatpush1.msra.mxu0 0.0
    %751 = vmatprep.subr.mxu0 0.0
    %752 = vmatpush1.msra.mxu0 0.0
    %753 = vmatprep.subr.mxu0 0.0
    %754 = vmatpush1.msra.mxu0 0.0
    %755 = vmatprep.subr.mxu0 0.0
    %756 = vmatpush1.msra.mxu0 0.0
    %757 = vmatprep.subr.mxu0 0.0
    %758 = vmatpush1.msra.mxu0 0.0
    %759 = vmatprep.subr.mxu0 0.0
    %760 = vmatpush1.msra.mxu0 0.0
    %761 = vmatprep.subr.mxu0 0.0
    %762 = vmatpush1.msra.mxu0 0.0
    %763 = vmatprep.subr.mxu0 0.0
    %764 = vmatpush1.msra.mxu0 0.0
    %765 = vmatprep.subr.mxu0 0.0
    %766 = vmatpush1.msra.mxu0 0.0
    %767 = vmatprep.subr.mxu0 0.0
    %768 = vmatpush1.msra.mxu0 0.0
    %769 = vmatprep.subr.mxu0 0.0
    %770 = vmatpush1.msra.mxu0 0.0
    %771 = vmatprep.subr.mxu0 0.0
    %772 = vmatpush1.msra.mxu0 0.0
    %773 = vmatprep.subr.mxu0 0.0
    %774 = vmatpush1.msra.mxu0 0.0
    %775 = vmatprep.subr.mxu0 0.0
    %776 = vmatpush1.msra.mxu0 0.0
    %777 = vmatprep.subr.mxu0 0.0
    %778 = vmatpush1.msra.mxu0 0.0
    %779 = vmatprep.subr.mxu0 0.0
    %780 = vmatpush1.msra.mxu0 0.0
    %781 = vmatprep.subr.mxu0 0.0
    %782 = vmatpush1.msra.mxu0 0.0
    %783 = vmatprep.subr.mxu0 0.0
    %784 = vmatpush1.msra.mxu0 0.0
    %785 = vmatprep.subr.mxu0 0.0
    %786 = vmatpush1.msra.mxu0 0.0
    %787 = vmatprep.subr.mxu0 0.0
    %788 = vmatpush1.msra.mxu0 0.0
    %789 = vmatprep.subr.mxu0 0.0
    %790 = vmatpush1.msra.mxu0 0.0
    %791 = vmatprep.subr.mxu0 0.0
    %792 = vmatpush1.msra.mxu0 0.0
    %793 = vmatprep.subr.mxu0 0.0
    %794 = vmatpush1.msra.mxu0 0.0
    %795 = vmatprep.subr.mxu0 0.0
    %796 = vmatpush1.msra.mxu0 0.0
    %797 = vmatprep.mubr.f32.mxu0 0.0
    %798 = vmatmul.mubr.f32.gmra.mrb[0].mxu0 %v731
    %v799 = vpop.f32.mrb[0].mxu0
    %v800 = vadd.f32 %v448, %v799
    %v801 = vpop.f32.mrb[0].mxu0
    %802 = vdwg.mxu0
    %v803 = vsel %vm522, %v800, 0.0
    %804 = vadd.xlane.f32.xlu0 %v803
    %v805 = vpop.xlane.xlu0 %804
    %v806 = vmul.f32 %v805, %v526
    %v807 = vsub.f32 %v800, %v806
    %v808 = vmul.f32 %v807, %v807
    %v809 = vsel %vm522, %v808, 0.0
    %810 = vadd.xlane.f32.xlu0 %v809
    %v811 = vpop.xlane.xlu0 %810
    %v812 = vmul.f32 %v811, %v526
    %v813 = vadd.f32 %v812, 1e-05
    %v814 = vrsqrt.pop %v813
    %v815 = vmul.f32 %v807, %v814
    %v816 = vmul.f32 %v815, %v537
    %v817 = vadd.f32 %v816, %v539
    %vm818 = vcmp.ge.f32.partialorder %v817, 0.0
    %v819 = vmul.f32 %v817, 0.02
    %v820 = vsel %vm818, %v817, %v819
    %v821 = vadd.f32 %v170, %v820
    %v823 = vrot.slane %v821, 7
    %vm825 = vcmask 1040384
    %v826 = vsel %vm825, %v544, %v823
    %v829 = vunpack.c.l.s4 1966171168
    %v830 = vunpack.c.0.s8 %v829
    %v831 = vlaneseq
    %v832 = vshrl.u32 %v831, 7
    %v833 = vsub.s32 %v830, %v832
    %v834 = vrot.slane %v826, %v833
    %v835 = vcombine.high %v834, %v834
    %v837 = vunpack.c.l.s4 1966171168
    %v838 = vunpack.c.0.s8 %v837
    %v839 = vlaneseq
    %v840 = vshrl.u32 %v839, 7
    %v841 = vsub.s32 %v838, %v840
    %v842 = vrot.slane %v834, %v841
    %v844 = vunpack.c.l.s4 1966171168
    %v845 = vunpack.c.0.s8 %v844
    %v846 = vlaneseq
    %v847 = vshrl.u32 %v846, 7
    %v848 = vsub.s32 %v845, %v847
    %v849 = vrot.slane %v835, %v848
    %852 = vst.msk [vmem:[#allocation7] sm:$0x1] %vm522, %v842
    %853 = vst.msk [vmem:[#allocation7 + $0x1] sm:$0x1] %vm522, %v849
    // Predicated region
    $region46: #{tpu_custom_call.1} parent=1 // pred_check
      _
    $region47: #{tpu_custom_call.1} parent=1 // pred_check_branch
      %855 = sbr.rel (0) target = $region49
    $region48: #{tpu_custom_call.1} parent=1 // pred_region
      %s857 = ssub.s32 32, 32
      %858 = vsyncadd [#allocation4], %s857
      %s859 = sshll.u32 [#allocation7], 4
      %s860 = int_to_ptr.vmem [resolvable:$true] %s859
      %865 = dma.vmem_to_hbm [thread:$0]  %s860, 32, %s9, [#allocation4], 16, 16, 1
    $region49: #{tpu_custom_call.1} parent=1 // pred_fallthru
      _
    // Predicated region
    $region50: #{tpu_custom_call.1} parent=1 // pred_check
      _
    $region51: #{tpu_custom_call.1} parent=1 // pred_check_branch
      %867 = sbr.rel (0) target = $region53
    $region52: #{tpu_custom_call.1} parent=1 // pred_region
      %868 = dma.done [#allocation4], 32
    $region53: #{tpu_custom_call.1} parent=1 // pred_fallthru
      _
    %869 = vsyncpa [#allocation3], 1
    %870 = vsyncpa [#allocation6], 1
    %871 = vsyncpa [#allocation4], 1

</llo_original>
